<compile_context>
chip_gen: v7x
topology: tpu7x:2x2x1
jax: 0.10.0
libtpu: 0.0.40
codegen_flags: <defaults>
</compile_context>

<pallas_src>
import jax
import jax.numpy as jnp
from jax import lax
from jax.experimental import pallas as pl
from jax.experimental.pallas import tpu as pltpu

IN_DIM = 32
H1 = 128
H2 = 128
BN_EPS = 1e-5


def _round_up(a, m):
    return (a + m - 1) // m * m


def mlp_kernel(x_ref, w1_ref, b1_ref, w2_ref, b2_ref, w3_ref, b3_ref, o_ref):
    # layer_1 + ReLU   (BatchNorm1 folded into w2/b2 at prep time)
    h1 = jnp.dot(x_ref[...], w1_ref[...],
                 preferred_element_type=jnp.float32)            # [TB, 128] f32
    h1 = jnp.maximum(h1 + b1_ref[...], 0.0)                     # f32 VPU (v5e-safe)

    # layer_2 + ReLU   (BatchNorm2 folded into w3/b3; dropout = identity in eval)
    h2 = jnp.dot(h1.astype(jnp.bfloat16), w2_ref[...],
                 preferred_element_type=jnp.float32)            # [TB, 128] f32
    h2 = jnp.maximum(h2 + b2_ref[...], 0.0)

    # layer_out as an NT matmul so the stored block is lane-dense: [1, TB]
    out = lax.dot_general(
        w3_ref[...], h2.astype(jnp.bfloat16),
        dimension_numbers=(((1,), (1,)), ((), ())),
        preferred_element_type=jnp.float32)                     # [1, TB]
    o_ref[...] = out + b3_ref[0]                                # scalar bias from SMEM


def simple_model_forward(x, params, *, tile_b=512):
    """x: [B, 32] float32 -> [B] float32 (matches .squeeze(-1))."""
    B, D = x.shape
    assert D == IN_DIM
    w1, b1, w2, b2, w3, b3 = params

    # Batch tile: big enough to fill the MXU M dim and amortize per-step
    # overhead, but no larger than the lane-aligned padded batch.
    # Kept a multiple of 128 (v5e MXU granularity; 512 default = 2x256 for v6e).
    assert tile_b % 128 == 0
    tile_b = max(128, min(tile_b, _round_up(B, 128)))
    Bp = _round_up(B, tile_b)

    xb = x.astype(jnp.bfloat16)
    if Bp != B:
        xb = jnp.pad(xb, ((0, Bp - B), (0, 0)))

    grid = (Bp // tile_b,)  # on v7x, >=2 steps lets the 2 TCs split the batch

    out = pl.pallas_call(
        mlp_kernel,
        out_shape=jax.ShapeDtypeStruct((1, Bp), jnp.float32),
        grid_spec=pltpu.PrefetchScalarGridSpec(
            num_scalar_prefetch=0,
            grid=grid,
            in_specs=[
                pl.BlockSpec((tile_b, IN_DIM), lambda i: (i, 0)),   # x tile (bf16)
                pl.BlockSpec((IN_DIM, H1),     lambda i: (0, 0)),   # w1  (bf16)
                pl.BlockSpec((1, H1),          lambda i: (0, 0)),   # b1  (f32)
                pl.BlockSpec((H1, H2),         lambda i: (0, 0)),   # w2' (bf16, BN1 folded)
                pl.BlockSpec((1, H2),          lambda i: (0, 0)),   # b2' (f32)
                pl.BlockSpec((1, H2),          lambda i: (0, 0)),   # w3' row (bf16, BN2 folded)
                pl.BlockSpec(memory_space=pltpu.MemorySpace.SMEM),  # b3' scalar (f32, SMEM)
            ],
            out_specs=pl.BlockSpec((1, tile_b), lambda i: (0, i)),  # lane-dense output
        ),
        compiler_params=pltpu.CompilerParams(
            dimension_semantics=("parallel",)),
    )(xb, w1, b1, w2, b2, w3, b3)

    return out.reshape(Bp)[:B]  # squeeze(-1) + drop batch padding


# ----------------------------------------------------------------------------
# Parameter handling
# ----------------------------------------------------------------------------

def init_raw_params(key):
    """Raw PyTorch-layout parameters (Linear: [out,in] weights; BN: per-feature
    gamma/beta/running_mean/running_var), with nn.Linear default uniform init."""
    ks = jax.random.split(key, 14)

    def linear(kw, kb, fan_in, fan_out):
        bound = 1.0 / jnp.sqrt(fan_in)
        w = jax.random.uniform(kw, (fan_out, fan_in), jnp.float32, -bound, bound)
        b = jax.random.uniform(kb, (fan_out,), jnp.float32, -bound, bound)
        return w, b

    w1, b1 = linear(ks[0], ks[1], IN_DIM, H1)
    w2, b2 = linear(ks[2], ks[3], H1, H2)
    w3, b3 = linear(ks[4], ks[5], H2, 1)

    def bn(kg, kb, km, kv, n):
        gamma = jax.random.uniform(kg, (n,), jnp.float32, 0.5, 1.5)
        beta = 0.1 * jax.random.normal(kb, (n,), jnp.float32)
        mean = 0.1 * jax.random.normal(km, (n,), jnp.float32)
        var = jax.random.uniform(kv, (n,), jnp.float32, 0.5, 1.5)
        return gamma, beta, mean, var

    g1, be1, m1, v1 = bn(ks[6], ks[7], ks[8], ks[9], H1)
    g2, be2, m2, v2 = bn(ks[10], ks[11], ks[12], ks[13], H2)
    return (w1, b1, w2, b2, w3, b3, g1, be1, m1, v1, g2, be2, m2, v2)


def prepare_params(raw):
    """Fold eval-mode BatchNorm into the following Linear, transpose weights to
    [in, out], and cast MXU operands to bf16 (biases stay f32)."""
    (w1, b1, w2, b2, w3, b3, g1, be1, m1, v1, g2, be2, m2, v2) = raw

    s1 = g1 / jnp.sqrt(v1 + BN_EPS)
    t1 = be1 - m1 * s1
    s2 = g2 / jnp.sqrt(v2 + BN_EPS)
    t2 = be2 - m2 * s2

    w1k = w1.T.astype(jnp.bfloat16)                       # [32, 128]
    b1k = b1.reshape(1, H1)                               # f32

    # BN1 folded into layer_2:  (a*s1+t1) @ w2.T = a @ (s1[:,None]*w2.T) + (t1@w2.T)
    w2k = (s1[:, None] * w2.T).astype(jnp.bfloat16)       # [128, 128]
    b2k = (t1 @ w2.T + b2).reshape(1, H2)                 # f32

    # BN2 folded into layer_out; keep w3 as a [1, 128] row for the NT matmul.
    w3k = (w3.reshape(-1) * s2)[None, :].astype(jnp.bfloat16)   # [1, 128]
    b3k = (jnp.dot(t2, w3.reshape(-1)) + b3[0]).reshape(1)      # f32 scalar -> SMEM

    return (w1k, b1k, w2k, b2k, w3k, b3k)


def reference_forward(x, raw):
    """Pure-JAX f32 reference with the original (unfolded) parameters."""
    (w1, b1, w2, b2, w3, b3, g1, be1, m1, v1, g2, be2, m2, v2) = raw
    h = jnp.maximum(x @ w1.T + b1, 0.0)
    h = (h - m1) / jnp.sqrt(v1 + BN_EPS) * g1 + be1
    h = jnp.maximum(h @ w2.T + b2, 0.0)
    h = (h - m2) / jnp.sqrt(v2 + BN_EPS) * g2 + be2
    # dropout: identity in eval mode
    return (h @ w3.T + b3)[:, 0]


if __name__ == "__main__":
    key = jax.random.PRNGKey(0)
    kp, kx = jax.random.split(key)
    raw = init_raw_params(kp)
    params = prepare_params(raw)

    B = 200  # deliberately not a multiple of the batch tile -> exercises padding
    x = jax.random.normal(kx, (B, IN_DIM), jnp.float32)

    out = simple_model_forward(x, params, tile_b=512)
    out = jax.block_until_ready(out)

    ref = reference_forward(x, raw)
    assert out.shape == (B,)
    err = float(jnp.max(jnp.abs(out - ref)))
    assert err < 5e-2, f"max abs err {err}"  # bf16 MXU inputs vs f32 reference
    print("KERNEL_OK")
</pallas_src>

<mosaic_0001>
module attributes {stable_mosaic.version = 11 : i64} {
  func.func @mlp_kernel(%arg0: i32, %arg1: memref<256x32xbf16, #tpu.memory_space<vmem>>, %arg2: memref<32x128xbf16, #tpu.memory_space<vmem>>, %arg3: memref<1x128xf32, #tpu.memory_space<vmem>>, %arg4: memref<128x128xbf16, #tpu.memory_space<vmem>>, %arg5: memref<1x128xf32, #tpu.memory_space<vmem>>, %arg6: memref<1x128xbf16, #tpu.memory_space<vmem>>, %arg7: memref<1xf32, #tpu.memory_space<smem>>, %arg8: memref<1x256xf32, #tpu.memory_space<vmem>>) attributes {dimension_semantics = [#tpu.dimension_semantics<parallel>], iteration_bounds = array<i64: 1>, scalar_prefetch = 0 : i64, scratch_operands = 0 : i64, tpu.core_type = #tpu.core_type<tc>, window_params = [{transform_indices = @transform_0, window_bounds = array<i64: 256, 32>}, {pipeline_mode = #tpu.pipeline_mode<synchronous>, transform_indices = @transform_1, window_bounds = array<i64: 32, 128>}, {pipeline_mode = #tpu.pipeline_mode<synchronous>, transform_indices = @transform_2, window_bounds = array<i64: 1, 128>}, {pipeline_mode = #tpu.pipeline_mode<synchronous>, transform_indices = @transform_3, window_bounds = array<i64: 128, 128>}, {pipeline_mode = #tpu.pipeline_mode<synchronous>, transform_indices = @transform_4, window_bounds = array<i64: 1, 128>}, {pipeline_mode = #tpu.pipeline_mode<synchronous>, transform_indices = @transform_5, window_bounds = array<i64: 1, 128>}, {transform_indices = @transform_6, window_bounds = array<i64: 1>}, {transform_indices = @transform_7, window_bounds = array<i64: 1, 256>}]} {
    %c0 = arith.constant 0 : index
    %c0_0 = arith.constant 0 : index
    %0 = vector.load %arg1[%c0, %c0_0] : memref<256x32xbf16, #tpu.memory_space<vmem>>, vector<256x32xbf16>
    %c0_1 = arith.constant 0 : index
    %c0_2 = arith.constant 0 : index
    %1 = vector.load %arg2[%c0_1, %c0_2] : memref<32x128xbf16, #tpu.memory_space<vmem>>, vector<32x128xbf16>
    %cst = arith.constant dense<0.000000e+00> : vector<256x128xf32>
    %2 = tpu.matmul %0, %1, %cst {dimension_numbers = #tpu.dot_dimension_numbers<[1], [0], [0], [1], [0, 0, 1, 1], [], []>} : vector<256x32xbf16>, vector<32x128xbf16>, vector<256x128xf32> -> vector<256x128xf32>
    %c0_3 = arith.constant 0 : index
    %c0_4 = arith.constant 0 : index
    %3 = vector.load %arg3[%c0_3, %c0_4] : memref<1x128xf32, #tpu.memory_space<vmem>>, vector<1x128xf32>
    %4 = vector.broadcast %3 : vector<1x128xf32> to vector<256x128xf32>
    %5 = arith.addf %2, %4 : vector<256x128xf32>
    %cst_5 = arith.constant 0.000000e+00 : f32
    %6 = vector.broadcast %cst_5 : f32 to vector<256x128xf32>
    %7 = arith.maximumf %5, %6 : vector<256x128xf32>
    %8 = arith.truncf %7 : vector<256x128xf32> to vector<256x128xbf16>
    %c0_6 = arith.constant 0 : index
    %c0_7 = arith.constant 0 : index
    %9 = vector.load %arg4[%c0_6, %c0_7] : memref<128x128xbf16, #tpu.memory_space<vmem>>, vector<128x128xbf16>
    %cst_8 = arith.constant dense<0.000000e+00> : vector<256x128xf32>
    %10 = tpu.matmul %8, %9, %cst_8 {dimension_numbers = #tpu.dot_dimension_numbers<[1], [0], [0], [1], [0, 0, 1, 1], [], []>} : vector<256x128xbf16>, vector<128x128xbf16>, vector<256x128xf32> -> vector<256x128xf32>
    %c0_9 = arith.constant 0 : index
    %c0_10 = arith.constant 0 : index
    %11 = vector.load %arg5[%c0_9, %c0_10] : memref<1x128xf32, #tpu.memory_space<vmem>>, vector<1x128xf32>
    %12 = vector.broadcast %11 : vector<1x128xf32> to vector<256x128xf32>
    %13 = arith.addf %10, %12 : vector<256x128xf32>
    %cst_11 = arith.constant 0.000000e+00 : f32
    %14 = vector.broadcast %cst_11 : f32 to vector<256x128xf32>
    %15 = arith.maximumf %13, %14 : vector<256x128xf32>
    %c0_12 = arith.constant 0 : index
    %c0_13 = arith.constant 0 : index
    %16 = vector.load %arg6[%c0_12, %c0_13] : memref<1x128xbf16, #tpu.memory_space<vmem>>, vector<1x128xbf16>
    %17 = arith.truncf %15 : vector<256x128xf32> to vector<256x128xbf16>
    %cst_14 = arith.constant dense<0.000000e+00> : vector<1x256xf32>
    %18 = tpu.matmul %16, %17, %cst_14 {dimension_numbers = #tpu.dot_dimension_numbers<[1], [1], [0], [0], [0, 0, 1, 0], [], []>} : vector<1x128xbf16>, vector<256x128xbf16>, vector<1x256xf32> -> vector<1x256xf32>
    %c0_15 = arith.constant 0 : index
    %19 = memref.load %arg7[%c0_15] : memref<1xf32, #tpu.memory_space<smem>>
    %20 = vector.broadcast %19 : f32 to vector<1x256xf32>
    %21 = arith.addf %18, %20 : vector<1x256xf32>
    %c0_16 = arith.constant 0 : index
    %c0_17 = arith.constant 0 : index
    %22 = vector.load %arg8[%c0_16, %c0_17] : memref<1x256xf32, #tpu.memory_space<vmem>>, vector<1x256xf32>
    tpu.vector_store %arg8[%c0_16, %c0_17], %21 {strides = array<i32>} : memref<1x256xf32, #tpu.memory_space<vmem>>, vector<1x256xf32>,
    return
  }
  func.func @transform_0(%arg0: i32) -> (i32, i32) {
    %c0_i32 = arith.constant 0 : i32
    %c0_i32_0 = arith.constant 0 : i32
    return %arg0, %c0_i32 : i32, i32
  }
  func.func @transform_1(%arg0: i32) -> (i32, i32) {
    %c0_i32 = arith.constant 0 : i32
    %c0_i32_0 = arith.constant 0 : i32
    %c0_i32_1 = arith.constant 0 : i32
    return %c0_i32, %c0_i32_0 : i32, i32
  }
  func.func @transform_2(%arg0: i32) -> (i32, i32) {
    %c0_i32 = arith.constant 0 : i32
    %c0_i32_0 = arith.constant 0 : i32
    %c0_i32_1 = arith.constant 0 : i32
    return %c0_i32, %c0_i32_0 : i32, i32
  }
  func.func @transform_3(%arg0: i32) -> (i32, i32) {
    %c0_i32 = arith.constant 0 : i32
    %c0_i32_0 = arith.constant 0 : i32
    %c0_i32_1 = arith.constant 0 : i32
    return %c0_i32, %c0_i32_0 : i32, i32
  }
  func.func @transform_4(%arg0: i32) -> (i32, i32) {
    %c0_i32 = arith.constant 0 : i32
    %c0_i32_0 = arith.constant 0 : i32
    %c0_i32_1 = arith.constant 0 : i32
    return %c0_i32, %c0_i32_0 : i32, i32
  }
  func.func @transform_5(%arg0: i32) -> (i32, i32) {
    %c0_i32 = arith.constant 0 : i32
    %c0_i32_0 = arith.constant 0 : i32
    %c0_i32_1 = arith.constant 0 : i32
    return %c0_i32, %c0_i32_0 : i32, i32
  }
  func.func @transform_6(%arg0: i32) -> i32 {
    %c0_i32 = arith.constant 0 : i32
    %c0_i32_0 = arith.constant 0 : i32
    return %c0_i32 : i32
  }
  func.func @transform_7(%arg0: i32) -> (i32, i32) {
    %c0_i32 = arith.constant 0 : i32
    %c0_i32_0 = arith.constant 0 : i32
    return %c0_i32, %arg0 : i32, i32
  }
}

</mosaic_0001>

<llo_original>
// kernel: tpu_custom_call.1
$region0: #{tpu_custom_call.1}
  #allocation0 [shape = 'u32[]', space=smem, size = 0x4, offset = 0x4, fixed_abs, tag = 'smem constant byte address 0x4 - core index']
  #allocation1 [shape = 'u32[144,128]{1,0:T(1,128)}', space=vmem, size = 0x12000, scoped, tag = 'internal scratch']
  #allocation2 [shape = 'f32[1]{0:T(128)S(6)}', space=smem, size = 0x200, scoped, tag = 'scoped memory for tpu_custom_call.1']
  %s0 = inlined_call_operand.vmem [shape: bf16[256,32], index: 0, kind: input, shape index: {}]
  %s1 = inlined_call_operand.vmem [shape: bf16[32,128], index: 1, kind: input, shape index: {}]
  %s2 = inlined_call_operand.vmem [shape: f32[1,128], index: 2, kind: input, shape index: {}]
  %s3 = inlined_call_operand.vmem [shape: bf16[128,128], index: 3, kind: input, shape index: {}]
  %s4 = inlined_call_operand.vmem [shape: f32[1,128], index: 4, kind: input, shape index: {}]
  %s5 = inlined_call_operand.vmem [shape: bf16[1,128], index: 5, kind: input, shape index: {}]
  %s6 = inlined_call_operand.<no memory space> [shape: f32[1], index: 6, kind: input, shape index: {}]
  %s7 = inlined_call_operand.hbm [shape: f32[1,256], index: 7, kind: output, shape index: {}]
  %s8 = sld [smem:[#allocation0]]
  $region38: #{tpu_custom_call.1} parent=0
    _
  %s10 = ssub.s32 1, %s8
  %s11 = scalar_select 0, %s10, %s8
  %12 = sst [smem:[#allocation2]] %s6
  $region1: #{tpu_custom_call.1} parent=0
    #allocation3 [shape = 'u8[1024]{0}', space=vmem, size = 0x400, scoped, tag = 'output window, operand 0, single buffered']
    #allocation4 [shape = 's32[1]{0}', space=sflag, size = 0x4, scoped, tag = 'scoped memory for tpu_custom_call.1']
    %13 = vsyncpa [#allocation4], 0
    // Predicated region
    $region2: #{tpu_custom_call.1} parent=1 // pred_check
      _
    $region3: #{tpu_custom_call.1} parent=1 // pred_check_branch
      %15 = sbr.rel (0) target = $region5
    $region4: #{tpu_custom_call.1} parent=1 // pred_region
      _
    $region5: #{tpu_custom_call.1} parent=1 // pred_fallthru
      _
    // Predicated region
    $region6: #{tpu_custom_call.1} parent=1 // pred_check
      _
    $region7: #{tpu_custom_call.1} parent=1 // pred_check_branch
      %17 = sbr.rel (0) target = $region9
    $region8: #{tpu_custom_call.1} parent=1 // pred_region
      _
    $region9: #{tpu_custom_call.1} parent=1 // pred_fallthru
      _
    // Predicated region
    $region10: #{tpu_custom_call.1} parent=1 // pred_check
      _
    $region11: #{tpu_custom_call.1} parent=1 // pred_check_branch
      %19 = sbr.rel (0) target = $region13
    $region12: #{tpu_custom_call.1} parent=1 // pred_region
      _
    $region13: #{tpu_custom_call.1} parent=1 // pred_fallthru
      _
    // Predicated region
    $region14: #{tpu_custom_call.1} parent=1 // pred_check
      _
    $region15: #{tpu_custom_call.1} parent=1 // pred_check_branch
      %21 = sbr.rel (0) target = $region17
    $region16: #{tpu_custom_call.1} parent=1 // pred_region
      _
    $region17: #{tpu_custom_call.1} parent=1 // pred_fallthru
      _
    // Predicated region
    $region18: #{tpu_custom_call.1} parent=1 // pred_check
      _
    $region19: #{tpu_custom_call.1} parent=1 // pred_check_branch
      %23 = sbr.rel (0) target = $region21
    $region20: #{tpu_custom_call.1} parent=1 // pred_region
      _
    $region21: #{tpu_custom_call.1} parent=1 // pred_fallthru
      _
    // Predicated region
    $region22: #{tpu_custom_call.1} parent=1 // pred_check
      _
    $region23: #{tpu_custom_call.1} parent=1 // pred_check_branch
      %25 = sbr.rel (0) target = $region25
    $region24: #{tpu_custom_call.1} parent=1 // pred_region
      _
    $region25: #{tpu_custom_call.1} parent=1 // pred_fallthru
      _
    // Predicated region
    $region26: #{tpu_custom_call.1} parent=1 // pred_check
      _
    $region27: #{tpu_custom_call.1} parent=1 // pred_check_branch
      %27 = sbr.rel (0) target = $region29
    $region28: #{tpu_custom_call.1} parent=1 // pred_region
      _
    $region29: #{tpu_custom_call.1} parent=1 // pred_fallthru
      _
    %v29 = vld [vmem:[%s0] sm:$0xf]
    %v30 = vld [vmem:[%s0 + $0x4] sm:$0xf]
    %v31 = vld [vmem:[%s0 + $0x8] sm:$0xf]
    %v32 = vld [vmem:[%s0 + $0xc] sm:$0xf]
    %v33 = vld [vmem:[%s0 + $0x10] sm:$0xf]
    %v34 = vld [vmem:[%s0 + $0x14] sm:$0xf]
    %v35 = vld [vmem:[%s0 + $0x18] sm:$0xf]
    %v36 = vld [vmem:[%s0 + $0x1c] sm:$0xf]
    %v37 = vld [vmem:[%s0 + $0x20] sm:$0xf]
    %v38 = vld [vmem:[%s0 + $0x24] sm:$0xf]
    %v39 = vld [vmem:[%s0 + $0x28] sm:$0xf]
    %v40 = vld [vmem:[%s0 + $0x2c] sm:$0xf]
    %v41 = vld [vmem:[%s0 + $0x30] sm:$0xf]
    %v42 = vld [vmem:[%s0 + $0x34] sm:$0xf]
    %v43 = vld [vmem:[%s0 + $0x38] sm:$0xf]
    %v44 = vld [vmem:[%s0 + $0x3c] sm:$0xf]
    %v45 = vld [vmem:[%s0 + $0x40] sm:$0xf]
    %v46 = vld [vmem:[%s0 + $0x44] sm:$0xf]
    %v47 = vld [vmem:[%s0 + $0x48] sm:$0xf]
    %v48 = vld [vmem:[%s0 + $0x4c] sm:$0xf]
    %v49 = vld [vmem:[%s0 + $0x50] sm:$0xf]
    %v50 = vld [vmem:[%s0 + $0x54] sm:$0xf]
    %v51 = vld [vmem:[%s0 + $0x58] sm:$0xf]
    %v52 = vld [vmem:[%s0 + $0x5c] sm:$0xf]
    %v53 = vld [vmem:[%s0 + $0x60] sm:$0xf]
    %v54 = vld [vmem:[%s0 + $0x64] sm:$0xf]
    %v55 = vld [vmem:[%s0 + $0x68] sm:$0xf]
    %v56 = vld [vmem:[%s0 + $0x6c] sm:$0xf]
    %v57 = vld [vmem:[%s0 + $0x70] sm:$0xf]
    %v58 = vld [vmem:[%s0 + $0x74] sm:$0xf]
    %v59 = vld [vmem:[%s0 + $0x78] sm:$0xf]
    %v60 = vld [vmem:[%s0 + $0x7c] sm:$0xf]
    %v61 = vld [vmem:[%s1] sm:$0xf]
    %v62 = vld [vmem:[%s1 + $0x4] sm:$0xf]
    %v63 = vld [vmem:[%s1 + $0x8] sm:$0xf]
    %v64 = vld [vmem:[%s1 + $0xc] sm:$0xf]
    %v65 = vld [vmem:[%s2] sm:$0x1]
    %v67 = vlaneseq
    %v68 = vshrl.u32 %v67, 7
    %v69 = vsub.s32 0, %v68
    %v70 = vrot.slane %v65, %v69
    %v104 = vunpack.c.l.b16 %v29
    %v105 = vunpack.c.l.b16 %v30
    %v106 = vunpack.c.l.b16 %v31
    %v107 = vunpack.c.l.b16 %v32
    %v108 = vunpack.c.l.b16 %v33
    %v109 = vunpack.c.l.b16 %v34
    %v110 = vunpack.c.l.b16 %v35
    %v111 = vunpack.c.l.b16 %v36
    %v112 = vunpack.c.l.b16 %v37
    %v113 = vunpack.c.l.b16 %v38
    %v114 = vunpack.c.l.b16 %v39
    %v115 = vunpack.c.l.b16 %v40
    %v116 = vunpack.c.l.b16 %v41
    %v117 = vunpack.c.l.b16 %v42
    %v118 = vunpack.c.l.b16 %v43
    %v119 = vunpack.c.l.b16 %v44
    %v120 = vunpack.c.l.b16 %v45
    %v121 = vunpack.c.l.b16 %v46
    %v122 = vunpack.c.l.b16 %v47
    %v123 = vunpack.c.l.b16 %v48
    %v124 = vunpack.c.l.b16 %v49
    %v125 = vunpack.c.l.b16 %v50
    %v126 = vunpack.c.l.b16 %v51
    %v127 = vunpack.c.l.b16 %v52
    %v128 = vunpack.c.l.b16 %v53
    %v129 = vunpack.c.l.b16 %v54
    %v130 = vunpack.c.l.b16 %v55
    %v131 = vunpack.c.l.b16 %v56
    %v132 = vunpack.c.l.b16 %v57
    %v133 = vunpack.c.l.b16 %v58
    %v134 = vunpack.c.l.b16 %v59
    %v135 = vunpack.c.l.b16 %v60
    %v136 = vpack.c.b16 %v105, %v104
    %v137 = vpack.c.b16 %v107, %v106
    %v138 = vpack.c.b16 %v109, %v108
    %v139 = vpack.c.b16 %v111, %v110
    %v140 = vpack.c.b16 %v113, %v112
    %v141 = vpack.c.b16 %v115, %v114
    %v142 = vpack.c.b16 %v117, %v116
    %v143 = vpack.c.b16 %v119, %v118
    %v144 = vpack.c.b16 %v121, %v120
    %v145 = vpack.c.b16 %v123, %v122
    %v146 = vpack.c.b16 %v125, %v124
    %v147 = vpack.c.b16 %v127, %v126
    %v148 = vpack.c.b16 %v129, %v128
    %v149 = vpack.c.b16 %v131, %v130
    %v150 = vpack.c.b16 %v133, %v132
    %v151 = vpack.c.b16 %v135, %v134
    %v156 = vunpack.c.l.b16 %v61
    %v157 = vunpack.c.l.b16 %v62
    %v158 = vunpack.c.l.b16 %v63
    %v159 = vunpack.c.l.b16 %v64
    %v160 = vpack.c.b16 %v157, %v156
    %v161 = vpack.c.b16 %v159, %v158
    %vm164 = vcmask 261120
    %v166 = vsel %vm164, %v136, 0
    %v169 = vsel %vm164, %v137, 0
    %v172 = vsel %vm164, %v138, 0
    %v175 = vsel %vm164, %v139, 0
    %v178 = vsel %vm164, %v140, 0
    %v181 = vsel %vm164, %v141, 0
    %v184 = vsel %vm164, %v142, 0
    %v187 = vsel %vm164, %v143, 0
    %v190 = vsel %vm164, %v144, 0
    %v193 = vsel %vm164, %v145, 0
    %v196 = vsel %vm164, %v146, 0
    %v199 = vsel %vm164, %v147, 0
    %v202 = vsel %vm164, %v148, 0
    %v205 = vsel %vm164, %v149, 0
    %v208 = vsel %vm164, %v150, 0
    %v211 = vsel %vm164, %v151, 0
    %213 = vmatprep.subr.bf16.mxu0 0
    %214 = vmatpush1.bf16.msra.mxu0 %v160
    %215 = vmatprep.subr.bf16.mxu0 0
    %216 = vmatpush1.bf16.msra.mxu0 %v161
    %217 = vmatprep.subr.bf16.mxu0 0
    %218 = vmatpush1.bf16.msra.mxu0 0
    %219 = vmatprep.subr.bf16.mxu0 0
    %220 = vmatpush1.bf16.msra.mxu0 0
    %221 = vmatprep.subr.bf16.mxu0 0
    %222 = vmatpush1.bf16.msra.mxu0 0
    %223 = vmatprep.subr.bf16.mxu0 0
    %224 = vmatpush1.bf16.msra.mxu0 0
    %225 = vmatprep.subr.bf16.mxu0 0
    %226 = vmatpush1.bf16.msra.mxu0 0
    %227 = vmatprep.subr.bf16.mxu0 0
    %228 = vmatpush1.bf16.msra.mxu0 0
    %229 = vmatprep.subr.bf16.mxu0 0
    %230 = vmatpush1.bf16.msra.mxu0 0
    %231 = vmatprep.subr.bf16.mxu0 0
    %232 = vmatpush1.bf16.msra.mxu0 0
    %233 = vmatprep.subr.bf16.mxu0 0
    %234 = vmatpush1.bf16.msra.mxu0 0
    %235 = vmatprep.subr.bf16.mxu0 0
    %236 = vmatpush1.bf16.msra.mxu0 0
    %237 = vmatprep.subr.bf16.mxu0 0
    %238 = vmatpush1.bf16.msra.mxu0 0
    %239 = vmatprep.subr.bf16.mxu0 0
    %240 = vmatpush1.bf16.msra.mxu0 0
    %241 = vmatprep.subr.bf16.mxu0 0
    %242 = vmatpush1.bf16.msra.mxu0 0
    %243 = vmatprep.subr.bf16.mxu0 0
    %244 = vmatpush1.bf16.msra.mxu0 0
    %245 = vmatprep.mubr.bf16.mxu0 0
    %246 = vmatmul.mubr.bf16.gmra.mrb[0].mxu0 %v166
    %v247 = vpop.f32.mrb[0].mxu0
    %v248 = vadd.f32 %v70, %v247
    %v249 = vpop.f32.mrb[0].mxu0
    %v250 = vpop.f32.mrb[0].mxu0
    %v251 = vadd.f32 %v70, %v250
    %v252 = vpop.f32.mrb[0].mxu0
    %253 = vmatprep.mubr.bf16.mxu0 0
    %254 = vmatmul.mubr.bf16.gmra.mrb[0].mxu0 %v169
    %v255 = vpop.f32.mrb[0].mxu0
    %v256 = vadd.f32 %v70, %v255
    %v257 = vpop.f32.mrb[0].mxu0
    %v258 = vpop.f32.mrb[0].mxu0
    %v259 = vadd.f32 %v70, %v258
    %v260 = vpop.f32.mrb[0].mxu0
    %261 = vmatprep.mubr.bf16.mxu0 0
    %262 = vmatmul.mubr.bf16.gmra.mrb[0].mxu0 %v172
    %v263 = vpop.f32.mrb[0].mxu0
    %v264 = vadd.f32 %v70, %v263
    %v265 = vpop.f32.mrb[0].mxu0
    %v266 = vpop.f32.mrb[0].mxu0
    %v267 = vadd.f32 %v70, %v266
    %v268 = vpop.f32.mrb[0].mxu0
    %269 = vmatprep.mubr.bf16.mxu0 0
    %270 = vmatmul.mubr.bf16.gmra.mrb[0].mxu0 %v175
    %v271 = vpop.f32.mrb[0].mxu0
    %v272 = vadd.f32 %v70, %v271
    %v273 = vpop.f32.mrb[0].mxu0
    %v274 = vpop.f32.mrb[0].mxu0
    %v275 = vadd.f32 %v70, %v274
    %v276 = vpop.f32.mrb[0].mxu0
    %277 = vmatprep.mubr.bf16.mxu0 0
    %278 = vmatmul.mubr.bf16.gmra.mrb[0].mxu0 %v178
    %v279 = vpop.f32.mrb[0].mxu0
    %v280 = vadd.f32 %v70, %v279
    %v281 = vpop.f32.mrb[0].mxu0
    %v282 = vpop.f32.mrb[0].mxu0
    %v283 = vadd.f32 %v70, %v282
    %v284 = vpop.f32.mrb[0].mxu0
    %285 = vmatprep.mubr.bf16.mxu0 0
    %286 = vmatmul.mubr.bf16.gmra.mrb[0].mxu0 %v181
    %v287 = vpop.f32.mrb[0].mxu0
    %v288 = vadd.f32 %v70, %v287
    %v289 = vpop.f32.mrb[0].mxu0
    %v290 = vpop.f32.mrb[0].mxu0
    %v291 = vadd.f32 %v70, %v290
    %v292 = vpop.f32.mrb[0].mxu0
    %293 = vmatprep.mubr.bf16.mxu0 0
    %294 = vmatmul.mubr.bf16.gmra.mrb[0].mxu0 %v184
    %v295 = vpop.f32.mrb[0].mxu0
    %v296 = vadd.f32 %v70, %v295
    %v297 = vpop.f32.mrb[0].mxu0
    %v298 = vpop.f32.mrb[0].mxu0
    %v299 = vadd.f32 %v70, %v298
    %v300 = vpop.f32.mrb[0].mxu0
    %301 = vmatprep.mubr.bf16.mxu0 0
    %302 = vmatmul.mubr.bf16.gmra.mrb[0].mxu0 %v187
    %v303 = vpop.f32.mrb[0].mxu0
    %v304 = vadd.f32 %v70, %v303
    %v305 = vpop.f32.mrb[0].mxu0
    %v306 = vpop.f32.mrb[0].mxu0
    %v307 = vadd.f32 %v70, %v306
    %v308 = vpop.f32.mrb[0].mxu0
    %309 = vmatprep.mubr.bf16.mxu0 0
    %310 = vmatmul.mubr.bf16.gmra.mrb[0].mxu0 %v190
    %v311 = vpop.f32.mrb[0].mxu0
    %v312 = vadd.f32 %v70, %v311
    %v313 = vpop.f32.mrb[0].mxu0
    %v314 = vpop.f32.mrb[0].mxu0
    %v315 = vadd.f32 %v70, %v314
    %v316 = vpop.f32.mrb[0].mxu0
    %317 = vmatprep.mubr.bf16.mxu0 0
    %318 = vmatmul.mubr.bf16.gmra.mrb[0].mxu0 %v193
    %v319 = vpop.f32.mrb[0].mxu0
    %v320 = vadd.f32 %v70, %v319
    %v321 = vpop.f32.mrb[0].mxu0
    %v322 = vpop.f32.mrb[0].mxu0
    %v323 = vadd.f32 %v70, %v322
    %v324 = vpop.f32.mrb[0].mxu0
    %325 = vmatprep.mubr.bf16.mxu0 0
    %326 = vmatmul.mubr.bf16.gmra.mrb[0].mxu0 %v196
    %v327 = vpop.f32.mrb[0].mxu0
    %v328 = vadd.f32 %v70, %v327
    %v329 = vpop.f32.mrb[0].mxu0
    %v330 = vpop.f32.mrb[0].mxu0
    %v331 = vadd.f32 %v70, %v330
    %v332 = vpop.f32.mrb[0].mxu0
    %333 = vmatprep.mubr.bf16.mxu0 0
    %334 = vmatmul.mubr.bf16.gmra.mrb[0].mxu0 %v199
    %v335 = vpop.f32.mrb[0].mxu0
    %v336 = vadd.f32 %v70, %v335
    %v337 = vpop.f32.mrb[0].mxu0
    %v338 = vpop.f32.mrb[0].mxu0
    %v339 = vadd.f32 %v70, %v338
    %v340 = vpop.f32.mrb[0].mxu0
    %341 = vmatprep.mubr.bf16.mxu0 0
    %342 = vmatmul.mubr.bf16.gmra.mrb[0].mxu0 %v202
    %v343 = vpop.f32.mrb[0].mxu0
    %v344 = vadd.f32 %v70, %v343
    %v345 = vpop.f32.mrb[0].mxu0
    %v346 = vpop.f32.mrb[0].mxu0
    %v347 = vadd.f32 %v70, %v346
    %v348 = vpop.f32.mrb[0].mxu0
    %349 = vmatprep.mubr.bf16.mxu0 0
    %350 = vmatmul.mubr.bf16.gmra.mrb[0].mxu0 %v205
    %v351 = vpop.f32.mrb[0].mxu0
    %v352 = vadd.f32 %v70, %v351
    %v353 = vpop.f32.mrb[0].mxu0
    %v354 = vpop.f32.mrb[0].mxu0
    %v355 = vadd.f32 %v70, %v354
    %v356 = vpop.f32.mrb[0].mxu0
    %357 = vmatprep.mubr.bf16.mxu0 0
    %358 = vmatmul.mubr.bf16.gmra.mrb[0].mxu0 %v208
    %v359 = vpop.f32.mrb[0].mxu0
    %v360 = vadd.f32 %v70, %v359
    %v361 = vpop.f32.mrb[0].mxu0
    %v362 = vpop.f32.mrb[0].mxu0
    %v363 = vadd.f32 %v70, %v362
    %v364 = vpop.f32.mrb[0].mxu0
    %365 = vmatprep.mubr.bf16.mxu0 0
    %366 = vmatmul.mubr.bf16.gmra.mrb[0].mxu0 %v211
    %v367 = vpop.f32.mrb[0].mxu0
    %v368 = vadd.f32 %v70, %v367
    %v369 = vpop.f32.mrb[0].mxu0
    %v370 = vpop.f32.mrb[0].mxu0
    %v371 = vadd.f32 %v70, %v370
    %v372 = vpop.f32.mrb[0].mxu0
    %373 = vdwg.mxu0
    %v374 = vmax.f32 %v248, 0.0
    %v375 = vmax.f32 %v251, 0.0
    %v376 = vmax.f32 %v256, 0.0
    %v377 = vmax.f32 %v259, 0.0
    %v378 = vmax.f32 %v264, 0.0
    %v379 = vmax.f32 %v267, 0.0
    %v380 = vmax.f32 %v272, 0.0
    %v381 = vmax.f32 %v275, 0.0
    %v382 = vmax.f32 %v280, 0.0
    %v383 = vmax.f32 %v283, 0.0
    %v384 = vmax.f32 %v288, 0.0
    %v385 = vmax.f32 %v291, 0.0
    %v386 = vmax.f32 %v296, 0.0
    %v387 = vmax.f32 %v299, 0.0
    %v388 = vmax.f32 %v304, 0.0
    %v389 = vmax.f32 %v307, 0.0
    %v390 = vmax.f32 %v312, 0.0
    %v391 = vmax.f32 %v315, 0.0
    %v392 = vmax.f32 %v320, 0.0
    %v393 = vmax.f32 %v323, 0.0
    %v394 = vmax.f32 %v328, 0.0
    %v395 = vmax.f32 %v331, 0.0
    %v396 = vmax.f32 %v336, 0.0
    %v397 = vmax.f32 %v339, 0.0
    %v398 = vmax.f32 %v344, 0.0
    %v399 = vmax.f32 %v347, 0.0
    %v400 = vmax.f32 %v352, 0.0
    %v401 = vmax.f32 %v355, 0.0
    %v402 = vmax.f32 %v360, 0.0
    %v403 = vmax.f32 %v363, 0.0
    %v404 = vmax.f32 %v368, 0.0
    %v405 = vmax.f32 %v371, 0.0
    %v406 = vpack.c.bf16 %v375, %v374
    %v407 = vpack.c.bf16 %v377, %v376
    %v408 = vpack.c.bf16 %v379, %v378
    %v409 = vpack.c.bf16 %v381, %v380
    %v410 = vpack.c.bf16 %v383, %v382
    %v411 = vpack.c.bf16 %v385, %v384
    %v412 = vpack.c.bf16 %v387, %v386
    %v413 = vpack.c.bf16 %v389, %v388
    %v414 = vpack.c.bf16 %v391, %v390
    %v415 = vpack.c.bf16 %v393, %v392
    %v416 = vpack.c.bf16 %v395, %v394
    %v417 = vpack.c.bf16 %v397, %v396
    %v418 = vpack.c.bf16 %v399, %v398
    %v419 = vpack.c.bf16 %v401, %v400
    %v420 = vpack.c.bf16 %v403, %v402
    %v421 = vpack.c.bf16 %v405, %v404
    %v422 = vld [vmem:[%s3] sm:$0xf]
    %v423 = vld [vmem:[%s3 + $0x4] sm:$0xf]
    %v424 = vld [vmem:[%s3 + $0x8] sm:$0xf]
    %v425 = vld [vmem:[%s3 + $0xc] sm:$0xf]
    %v426 = vld [vmem:[%s3 + $0x10] sm:$0xf]
    %v427 = vld [vmem:[%s3 + $0x14] sm:$0xf]
    %v428 = vld [vmem:[%s3 + $0x18] sm:$0xf]
    %v429 = vld [vmem:[%s3 + $0x1c] sm:$0xf]
    %v430 = vld [vmem:[%s3 + $0x20] sm:$0xf]
    %v431 = vld [vmem:[%s3 + $0x24] sm:$0xf]
    %v432 = vld [vmem:[%s3 + $0x28] sm:$0xf]
    %v433 = vld [vmem:[%s3 + $0x2c] sm:$0xf]
    %v434 = vld [vmem:[%s3 + $0x30] sm:$0xf]
    %v435 = vld [vmem:[%s3 + $0x34] sm:$0xf]
    %v436 = vld [vmem:[%s3 + $0x38] sm:$0xf]
    %v437 = vld [vmem:[%s3 + $0x3c] sm:$0xf]
    %v438 = vld [vmem:[%s4] sm:$0x1]
    %v440 = vlaneseq
    %v441 = vshrl.u32 %v440, 7
    %v442 = vsub.s32 0, %v441
    %v443 = vrot.slane %v438, %v442
    %v461 = vunpack.c.l.b16 %v422
    %v462 = vunpack.c.l.b16 %v423
    %v463 = vunpack.c.l.b16 %v424
    %v464 = vunpack.c.l.b16 %v425
    %v465 = vunpack.c.l.b16 %v426
    %v466 = vunpack.c.l.b16 %v427
    %v467 = vunpack.c.l.b16 %v428
    %v468 = vunpack.c.l.b16 %v429
    %v469 = vunpack.c.l.b16 %v430
    %v470 = vunpack.c.l.b16 %v431
    %v471 = vunpack.c.l.b16 %v432
    %v472 = vunpack.c.l.b16 %v433
    %v473 = vunpack.c.l.b16 %v434
    %v474 = vunpack.c.l.b16 %v435
    %v475 = vunpack.c.l.b16 %v436
    %v476 = vunpack.c.l.b16 %v437
    %v477 = vpack.c.b16 %v462, %v461
    %v478 = vpack.c.b16 %v464, %v463
    %v479 = vpack.c.b16 %v466, %v465
    %v480 = vpack.c.b16 %v468, %v467
    %v481 = vpack.c.b16 %v470, %v469
    %v482 = vpack.c.b16 %v472, %v471
    %v483 = vpack.c.b16 %v474, %v473
    %v484 = vpack.c.b16 %v476, %v475
    %493 = vmatprep.subr.bf16.mxu0 0
    %494 = vmatpush1.bf16.msra.mxu0 %v477
    %495 = vmatprep.subr.bf16.mxu0 0
    %496 = vmatpush1.bf16.msra.mxu0 %v478
    %497 = vmatprep.subr.bf16.mxu0 0
    %498 = vmatpush1.bf16.msra.mxu0 %v479
    %499 = vmatprep.subr.bf16.mxu0 0
    %500 = vmatpush1.bf16.msra.mxu0 %v480
    %501 = vmatprep.subr.bf16.mxu0 0
    %502 = vmatpush1.bf16.msra.mxu0 %v481
    %503 = vmatprep.subr.bf16.mxu0 0
    %504 = vmatpush1.bf16.msra.mxu0 %v482
    %505 = vmatprep.subr.bf16.mxu0 0
    %506 = vmatpush1.bf16.msra.mxu0 %v483
    %507 = vmatprep.subr.bf16.mxu0 0
    %508 = vmatpush1.bf16.msra.mxu0 %v484
    %509 = vmatprep.subr.bf16.mxu0 0
    %510 = vmatpush1.bf16.msra.mxu0 0
    %511 = vmatprep.subr.bf16.mxu0 0
    %512 = vmatpush1.bf16.msra.mxu0 0
    %513 = vmatprep.subr.bf16.mxu0 0
    %514 = vmatpush1.bf16.msra.mxu0 0
    %515 = vmatprep.subr.bf16.mxu0 0
    %516 = vmatpush1.bf16.msra.mxu0 0
    %517 = vmatprep.subr.bf16.mxu0 0
    %518 = vmatpush1.bf16.msra.mxu0 0
    %519 = vmatprep.subr.bf16.mxu0 0
    %520 = vmatpush1.bf16.msra.mxu0 0
    %521 = vmatprep.subr.bf16.mxu0 0
    %522 = vmatpush1.bf16.msra.mxu0 0
    %523 = vmatprep.subr.bf16.mxu0 0
    %524 = vmatpush1.bf16.msra.mxu0 0
    %525 = vmatprep.mubr.bf16.mxu0 0
    %526 = vmatmul.mubr.bf16.gmra.mrb[0].mxu0 %v406
    %v527 = vpop.f32.mrb[0].mxu0
    %v528 = vadd.f32 %v443, %v527
    %v529 = vpop.f32.mrb[0].mxu0
    %v530 = vpop.f32.mrb[0].mxu0
    %v531 = vadd.f32 %v443, %v530
    %v532 = vpop.f32.mrb[0].mxu0
    %533 = vmatprep.mubr.bf16.mxu0 0
    %534 = vmatmul.mubr.bf16.gmra.mrb[0].mxu0 %v407
    %v535 = vpop.f32.mrb[0].mxu0
    %v536 = vadd.f32 %v443, %v535
    %v537 = vpop.f32.mrb[0].mxu0
    %v538 = vpop.f32.mrb[0].mxu0
    %v539 = vadd.f32 %v443, %v538
    %v540 = vpop.f32.mrb[0].mxu0
    %541 = vmatprep.mubr.bf16.mxu0 0
    %542 = vmatmul.mubr.bf16.gmra.mrb[0].mxu0 %v408
    %v543 = vpop.f32.mrb[0].mxu0
    %v544 = vadd.f32 %v443, %v543
    %v545 = vpop.f32.mrb[0].mxu0
    %v546 = vpop.f32.mrb[0].mxu0
    %v547 = vadd.f32 %v443, %v546
    %v548 = vpop.f32.mrb[0].mxu0
    %549 = vmatprep.mubr.bf16.mxu0 0
    %550 = vmatmul.mubr.bf16.gmra.mrb[0].mxu0 %v409
    %v551 = vpop.f32.mrb[0].mxu0
    %v552 = vadd.f32 %v443, %v551
    %v553 = vpop.f32.mrb[0].mxu0
    %v554 = vpop.f32.mrb[0].mxu0
    %v555 = vadd.f32 %v443, %v554
    %v556 = vpop.f32.mrb[0].mxu0
    %557 = vmatprep.mubr.bf16.mxu0 0
    %558 = vmatmul.mubr.bf16.gmra.mrb[0].mxu0 %v410
    %v559 = vpop.f32.mrb[0].mxu0
    %v560 = vadd.f32 %v443, %v559
    %v561 = vpop.f32.mrb[0].mxu0
    %v562 = vpop.f32.mrb[0].mxu0
    %v563 = vadd.f32 %v443, %v562
    %v564 = vpop.f32.mrb[0].mxu0
    %565 = vmatprep.mubr.bf16.mxu0 0
    %566 = vmatmul.mubr.bf16.gmra.mrb[0].mxu0 %v411
    %v567 = vpop.f32.mrb[0].mxu0
    %v568 = vadd.f32 %v443, %v567
    %v569 = vpop.f32.mrb[0].mxu0
    %v570 = vpop.f32.mrb[0].mxu0
    %v571 = vadd.f32 %v443, %v570
    %v572 = vpop.f32.mrb[0].mxu0
    %573 = vmatprep.mubr.bf16.mxu0 0
    %574 = vmatmul.mubr.bf16.gmra.mrb[0].mxu0 %v412
    %v575 = vpop.f32.mrb[0].mxu0
    %v576 = vadd.f32 %v443, %v575
    %v577 = vpop.f32.mrb[0].mxu0
    %v578 = vpop.f32.mrb[0].mxu0
    %v579 = vadd.f32 %v443, %v578
    %v580 = vpop.f32.mrb[0].mxu0
    %581 = vmatprep.mubr.bf16.mxu0 0
    %582 = vmatmul.mubr.bf16.gmra.mrb[0].mxu0 %v413
    %v583 = vpop.f32.mrb[0].mxu0
    %v584 = vadd.f32 %v443, %v583
    %v585 = vpop.f32.mrb[0].mxu0
    %v586 = vpop.f32.mrb[0].mxu0
    %v587 = vadd.f32 %v443, %v586
    %v588 = vpop.f32.mrb[0].mxu0
    %589 = vmatprep.mubr.bf16.mxu0 0
    %590 = vmatmul.mubr.bf16.gmra.mrb[0].mxu0 %v414
    %v591 = vpop.f32.mrb[0].mxu0
    %v592 = vadd.f32 %v443, %v591
    %v593 = vpop.f32.mrb[0].mxu0
    %v594 = vpop.f32.mrb[0].mxu0
    %v595 = vadd.f32 %v443, %v594
    %v596 = vpop.f32.mrb[0].mxu0
    %597 = vmatprep.mubr.bf16.mxu0 0
    %598 = vmatmul.mubr.bf16.gmra.mrb[0].mxu0 %v415
    %v599 = vpop.f32.mrb[0].mxu0
    %v600 = vadd.f32 %v443, %v599
    %v601 = vpop.f32.mrb[0].mxu0
    %v602 = vpop.f32.mrb[0].mxu0
    %v603 = vadd.f32 %v443, %v602
    %v604 = vpop.f32.mrb[0].mxu0
    %605 = vmatprep.mubr.bf16.mxu0 0
    %606 = vmatmul.mubr.bf16.gmra.mrb[0].mxu0 %v416
    %v607 = vpop.f32.mrb[0].mxu0
    %v608 = vadd.f32 %v443, %v607
    %v609 = vpop.f32.mrb[0].mxu0
    %v610 = vpop.f32.mrb[0].mxu0
    %v611 = vadd.f32 %v443, %v610
    %v612 = vpop.f32.mrb[0].mxu0
    %613 = vmatprep.mubr.bf16.mxu0 0
    %614 = vmatmul.mubr.bf16.gmra.mrb[0].mxu0 %v417
    %v615 = vpop.f32.mrb[0].mxu0
    %v616 = vadd.f32 %v443, %v615
    %v617 = vpop.f32.mrb[0].mxu0
    %v618 = vpop.f32.mrb[0].mxu0
    %v619 = vadd.f32 %v443, %v618
    %v620 = vpop.f32.mrb[0].mxu0
    %621 = vmatprep.mubr.bf16.mxu0 0
    %622 = vmatmul.mubr.bf16.gmra.mrb[0].mxu0 %v418
    %v623 = vpop.f32.mrb[0].mxu0
    %v624 = vadd.f32 %v443, %v623
    %v625 = vpop.f32.mrb[0].mxu0
    %v626 = vpop.f32.mrb[0].mxu0
    %v627 = vadd.f32 %v443, %v626
    %v628 = vpop.f32.mrb[0].mxu0
    %629 = vmatprep.mubr.bf16.mxu0 0
    %630 = vmatmul.mubr.bf16.gmra.mrb[0].mxu0 %v419
    %v631 = vpop.f32.mrb[0].mxu0
    %v632 = vadd.f32 %v443, %v631
    %v633 = vpop.f32.mrb[0].mxu0
    %v634 = vpop.f32.mrb[0].mxu0
    %v635 = vadd.f32 %v443, %v634
    %v636 = vpop.f32.mrb[0].mxu0
    %637 = vmatprep.mubr.bf16.mxu0 0
    %638 = vmatmul.mubr.bf16.gmra.mrb[0].mxu0 %v420
    %v639 = vpop.f32.mrb[0].mxu0
    %v640 = vadd.f32 %v443, %v639
    %v641 = vpop.f32.mrb[0].mxu0
    %v642 = vpop.f32.mrb[0].mxu0
    %v643 = vadd.f32 %v443, %v642
    %v644 = vpop.f32.mrb[0].mxu0
    %645 = vmatprep.mubr.bf16.mxu0 0
    %646 = vmatmul.mubr.bf16.gmra.mrb[0].mxu0 %v421
    %v647 = vpop.f32.mrb[0].mxu0
    %v648 = vadd.f32 %v443, %v647
    %v649 = vpop.f32.mrb[0].mxu0
    %v650 = vpop.f32.mrb[0].mxu0
    %v651 = vadd.f32 %v443, %v650
    %v652 = vpop.f32.mrb[0].mxu0
    %653 = vdwg.mxu0
    %v654 = vmax.f32 %v528, 0.0
    %v655 = vmax.f32 %v531, 0.0
    %v656 = vmax.f32 %v536, 0.0
    %v657 = vmax.f32 %v539, 0.0
    %v658 = vmax.f32 %v544, 0.0
    %v659 = vmax.f32 %v547, 0.0
    %v660 = vmax.f32 %v552, 0.0
    %v661 = vmax.f32 %v555, 0.0
    %v662 = vmax.f32 %v560, 0.0
    %v663 = vmax.f32 %v563, 0.0
    %v664 = vmax.f32 %v568, 0.0
    %v665 = vmax.f32 %v571, 0.0
    %v666 = vmax.f32 %v576, 0.0
    %v667 = vmax.f32 %v579, 0.0
    %v668 = vmax.f32 %v584, 0.0
    %v669 = vmax.f32 %v587, 0.0
    %v670 = vmax.f32 %v592, 0.0
    %v671 = vmax.f32 %v595, 0.0
    %v672 = vmax.f32 %v600, 0.0
    %v673 = vmax.f32 %v603, 0.0
    %v674 = vmax.f32 %v608, 0.0
    %v675 = vmax.f32 %v611, 0.0
    %v676 = vmax.f32 %v616, 0.0
    %v677 = vmax.f32 %v619, 0.0
    %v678 = vmax.f32 %v624, 0.0
    %v679 = vmax.f32 %v627, 0.0
    %v680 = vmax.f32 %v632, 0.0
    %v681 = vmax.f32 %v635, 0.0
    %v682 = vmax.f32 %v640, 0.0
    %v683 = vmax.f32 %v643, 0.0
    %v684 = vmax.f32 %v648, 0.0
    %v685 = vmax.f32 %v651, 0.0
    %v686 = vld [vmem:[%s5] sm:$0x1]
    %v687 = vpack.c.bf16 %v655, %v654
    %v688 = vpack.c.bf16 %v657, %v656
    %v689 = vpack.c.bf16 %v659, %v658
    %v690 = vpack.c.bf16 %v661, %v660
    %v691 = vpack.c.bf16 %v663, %v662
    %v692 = vpack.c.bf16 %v665, %v664
    %v693 = vpack.c.bf16 %v667, %v666
    %v694 = vpack.c.bf16 %v669, %v668
    %v695 = vpack.c.bf16 %v671, %v670
    %v696 = vpack.c.bf16 %v673, %v672
    %v697 = vpack.c.bf16 %v675, %v674
    %v698 = vpack.c.bf16 %v677, %v676
    %v699 = vpack.c.bf16 %v679, %v678
    %v700 = vpack.c.bf16 %v681, %v680
    %v701 = vpack.c.bf16 %v683, %v682
    %v702 = vpack.c.bf16 %v685, %v684
    %s703 = sld [smem:[#allocation2]]
    %v704 = vstv %s703
    %705 = vmatprep.subr.bf16.mxu0 0
    %706 = vmatpush1.bf16.xpose.msra.mxu0 %v687
    %707 = vmatprep.subr.bf16.mxu0 0
    %708 = vmatpush1.bf16.xpose.msra.mxu0 %v688
    %709 = vmatprep.subr.bf16.mxu0 0
    %710 = vmatpush1.bf16.xpose.msra.mxu0 %v689
    %711 = vmatprep.subr.bf16.mxu0 0
    %712 = vmatpush1.bf16.xpose.msra.mxu0 %v690
    %713 = vmatprep.subr.bf16.mxu0 0
    %714 = vmatpush1.bf16.xpose.msra.mxu0 %v691
    %715 = vmatprep.subr.bf16.mxu0 0
    %716 = vmatpush1.bf16.xpose.msra.mxu0 %v692
    %717 = vmatprep.subr.bf16.mxu0 0
    %718 = vmatpush1.bf16.xpose.msra.mxu0 %v693
    %719 = vmatprep.subr.bf16.mxu0 0
    %720 = vmatpush1.bf16.xpose.msra.mxu0 %v694
    %721 = vmatprep.subr.bf16.mxu0 0
    %722 = vmatpush1.bf16.xpose.msra.mxu0 %v695
    %723 = vmatprep.subr.bf16.mxu0 0
    %724 = vmatpush1.bf16.xpose.msra.mxu0 %v696
    %725 = vmatprep.subr.bf16.mxu0 0
    %726 = vmatpush1.bf16.xpose.msra.mxu0 %v697
    %727 = vmatprep.subr.bf16.mxu0 0
    %728 = vmatpush1.bf16.xpose.msra.mxu0 %v698
    %729 = vmatprep.subr.bf16.mxu0 0
    %730 = vmatpush1.bf16.xpose.msra.mxu0 %v699
    %731 = vmatprep.subr.bf16.mxu0 0
    %732 = vmatpush1.bf16.xpose.msra.mxu0 %v700
    %733 = vmatprep.subr.bf16.mxu0 0
    %734 = vmatpush1.bf16.xpose.msra.mxu0 %v701
    %735 = vmatprep.subr.bf16.mxu0 0
    %736 = vmatpush1.bf16.xpose.msra.mxu0 %v702
    %737 = vmatprep.mubr.bf16.mxu0 0
    %738 = vmatmul.mubr.bf16.gmra.mrb[0].mxu0 %v686
    %v739 = vpop.f32.mrb[0].mxu0
    %v740 = vadd.f32 %v704, %v739
    %v741 = vpop.f32.mrb[0].mxu0
    %v742 = vadd.f32 %v704, %v741
    %v743 = vpop.f32.mrb[0].mxu0
    %v744 = vpop.f32.mrb[0].mxu0
    %745 = vdwg.mxu0
    %v748 = vcombine.low %v740, %v742
    %v750 = vunpack.c.l.s4 1966171168
    %v751 = vunpack.c.0.s8 %v750
    %v752 = vlaneseq
    %v753 = vshrl.u32 %v752, 7
    %v754 = vsub.s32 %v751, %v753
    %v755 = vrot.slane %v748, %v754
    %v757 = vunpack.c.l.s4 1966171168
    %v758 = vunpack.c.0.s8 %v757
    %v759 = vlaneseq
    %v760 = vshrl.u32 %v759, 7
    %v761 = vsub.s32 %v758, %v760
    %v762 = vrot.slane %v755, %v761
    %v764 = vlaneseq
    %vm765 = vcmp.ge.s32.totalorder %v764, 0
    %vm766 = vcmp.lt.s32.totalorder %v764, 256
    %vm767 = vmand %vm765, %vm766
    %768 = vst.msk [vmem:[#allocation3] sm:$0x3] %vm767, %v762
    // Predicated region
    $region30: #{tpu_custom_call.1} parent=1 // pred_check
      _
    $region31: #{tpu_custom_call.1} parent=1 // pred_check_branch
      %770 = sbr.rel (0) target = $region33
    $region32: #{tpu_custom_call.1} parent=1 // pred_region
      %s772 = ssub.s32 32, 32
      %773 = vsyncadd [#allocation4], %s772
      %s775 = sshll.u32 [#allocation3], 4
      %s776 = int_to_ptr.vmem [resolvable:$true] %s775
      %778 = dma.vmem_to_hbm [thread:$0]  %s776, 32, %s7, [#allocation4]
    $region33: #{tpu_custom_call.1} parent=1 // pred_fallthru
      _
    // Predicated region
    $region34: #{tpu_custom_call.1} parent=1 // pred_check
      _
    $region35: #{tpu_custom_call.1} parent=1 // pred_check_branch
      %780 = sbr.rel (0) target = $region37
    $region36: #{tpu_custom_call.1} parent=1 // pred_region
      %781 = dma.done [#allocation4], 32
    $region37: #{tpu_custom_call.1} parent=1 // pred_fallthru
      _
    %782 = vsyncpa [#allocation4], 1

</llo_original>
